<compile_context>
chip_gen: v7x
topology: tpu7x:2x2x1
jax: 0.10.0
libtpu: 0.0.40
codegen_flags: <defaults>
</compile_context>

<pallas_src>
import functools

import jax
import jax.numpy as jnp
from jax.experimental import pallas as pl
from jax.experimental.pallas import tpu as pltpu

_LANE = 128              # lane width: last block dim multiples
_SUBLANE = 8             # f32 sublane width: second-to-last block dim multiples
_TILE_M_MAX = 1024       # biggest M tile we will try (review: 512-1024)
_VMEM_BUDGET = 40 << 20  # conservative per-TensorCore budget (v7x: 64 MiB/TC)


def _round_up(x, m):
    return (x + m - 1) // m * m


def _fused_fc_kernel(x_ref, w_ref, b_ref, o_ref, *, num_fcs, c_in, activation):
    # x_ref: (tile_m, c_in) input dtype      w_ref: (num_fcs, WK, NP) bf16 (resident)
    # b_ref: (num_fcs, 1, NP) f32 (resident) o_ref: (tile_m, NP) out dtype
    np_out = o_ref.shape[-1]
    h = x_ref[...].astype(jnp.bfloat16)            # in-kernel cast, hidden under MXU work
    for layer in range(num_fcs):                   # static unroll; weights stay in VMEM
        k = c_in if layer == 0 else np_out         # layer 0: contract only the real c_in rows
        y = jnp.dot(h, w_ref[layer, :k, :],        # MXU: bf16 x bf16 -> f32 accumulate
                    preferred_element_type=jnp.float32)
        y = y + b_ref[layer]                       # f32 bias broadcast (VPU)
        last = layer + 1 == num_fcs
        if activation == "relu":
            y = jnp.maximum(y, 0.0)                # VPU
            h = y if last else y.astype(jnp.bfloat16)
        elif activation == "tanh":
            # bf16 tanh for inner layers (bf16 EUP on v6e/v7x; next dot wants bf16 anyway)
            h = jnp.tanh(y) if last else jnp.tanh(y.astype(jnp.bfloat16))
        else:                                      # activation is None -> identity
            h = y if last else y.astype(jnp.bfloat16)
    o_ref[...] = h.astype(o_ref.dtype)


def init_fcmodules_params(key, in_channels, out_channels, num_fcs):
    """Deterministic init mimicking nn.Linear defaults (uniform +-1/sqrt(fan_in))."""
    params = []
    c_in = in_channels
    for _ in range(num_fcs):
        key, kw, kb = jax.random.split(key, 3)
        bound = 1.0 / jnp.sqrt(jnp.float32(c_in))
        w = jax.random.uniform(kw, (out_channels, c_in), jnp.float32,
                               minval=-bound, maxval=bound)
        b = jax.random.uniform(kb, (out_channels,), jnp.float32,
                               minval=-bound, maxval=bound)
        params.append((w, b))
        c_in = out_channels
    return params


def pack_fcmodules_params(params, in_channels):
    """Pre-transpose, zero-pad and stack the layer params ONCE (not per call).

    params: list of (weight (out, in), bias (out,)) in PyTorch convention.
    Returns (w_stack bf16 (num_fcs, WK, NP), b_stack f32 (num_fcs, 1, NP), c_out)
    with NP = round_up(c_out, 128) (lane-dense, minimal output width) and
    WK = max(round_up(c_in, 128), NP) (shared row dim; the kernel only ever
    reads layer 0's first c_in rows). Padding is exact: padded output lanes
    see zero weight columns and bias 0 -> act(0) = 0, so nothing leaks across
    layers.
    """
    num_fcs = len(params)
    c_out = params[-1][0].shape[0]
    np_out = _round_up(c_out, _LANE)
    wk = max(_round_up(in_channels, _LANE), np_out)
    w_stack = jnp.zeros((num_fcs, wk, np_out), jnp.float32)
    b_stack = jnp.zeros((num_fcs, 1, np_out), jnp.float32)
    for layer, (w, b) in enumerate(params):
        n, k = w.shape
        w_stack = w_stack.at[layer, :k, :n].set(w.T)   # stored (K, N): no per-call transpose
        b_stack = b_stack.at[layer, 0, :n].set(b)
    return w_stack.astype(jnp.bfloat16), b_stack, c_out


def _pick_tile_m(m, per_row_bytes, resident_bytes):
    """Largest multiple-of-8 M tile (<= _TILE_M_MAX) whose buffers fit the budget."""
    tile = min(_TILE_M_MAX, _round_up(m, _SUBLANE))
    while tile > _SUBLANE and resident_bytes + tile * per_row_bytes > _VMEM_BUDGET:
        tile = max(_SUBLANE, _round_up(tile // 2, _SUBLANE))
    return tile


def fcmodules_forward(x, packed, *, activation="relu", out_dtype=jnp.float32):
    """Fused FCModules forward.  x: (B, S, C_in) -> (B, S, C_out).

    Matches FCModules(order=('fc','act'), dropouts=None) in eval mode.
    Pass out_dtype=jnp.bfloat16 to halve output HBM writeback if downstream
    tolerates it (PyTorch parity keeps f32 by default).
    """
    # TODO(synk): order=('act','fc') and training-mode dropout are not implemented
    # (the module defaults exercised here are ('fc','act') and dropouts=None).
    w_stack, b_stack, c_out = packed
    B, S, c_in = x.shape
    num_fcs, wk, np_out = w_stack.shape
    M = B * S
    x2d = x.reshape(M, c_in)                       # reshape only: no pad/cast pass in HBM

    # --- explicit VMEM budgeting (per TensorCore; weights duplicated on v7x) ---
    resident = (w_stack.size * w_stack.dtype.itemsize      # single-buffered weights
                + b_stack.size * b_stack.dtype.itemsize)   # single-buffered biases
    out_itemsize = jnp.dtype(out_dtype).itemsize
    per_row = (2 * c_in * x2d.dtype.itemsize       # double-buffered x blocks
               + 2 * np_out * out_itemsize         # double-buffered out blocks
               + 3 * np_out * 4)                   # f32 temps headroom (y / epilogue)
    tile_m = _pick_tile_m(M, per_row, resident)
    grid = (pl.cdiv(M, tile_m),)

    vmem_need = resident + tile_m * per_row
    vmem_limit = int(min(64 << 20, max(vmem_need + (8 << 20), 16 << 20)))

    flops = 2 * M * np_out * (c_in + (num_fcs - 1) * np_out)
    transcendentals = M * np_out * num_fcs if activation == "tanh" else 0
    bytes_accessed = (x2d.size * x2d.dtype.itemsize
                      + w_stack.size * w_stack.dtype.itemsize
                      + b_stack.size * b_stack.dtype.itemsize
                      + M * np_out * out_itemsize)

    out = pl.pallas_call(
        functools.partial(_fused_fc_kernel, num_fcs=num_fcs, c_in=c_in,
                          activation=activation),
        out_shape=jax.ShapeDtypeStruct((M, np_out), out_dtype),
        grid=grid,
        in_specs=[
            # Activations: tiled over M only, fed in original dtype (cast in-kernel).
            pl.BlockSpec((tile_m, c_in), lambda i: (i, 0)),
            # Weights / biases: constant index_map + single buffer -> DMA'd once,
            # one resident VMEM copy for the whole grid (no wasted double buffer).
            pl.BlockSpec((num_fcs, wk, np_out), lambda i: (0, 0, 0),
                         pipeline_mode=pl.Buffered(1)),
            pl.BlockSpec((num_fcs, 1, np_out), lambda i: (0, 0, 0),
                         pipeline_mode=pl.Buffered(1)),
        ],
        # Lane-dense output: exactly round_up(c_out, 128) lanes -> unmasked stores.
        out_specs=pl.BlockSpec((tile_m, np_out), lambda i: (i, 0)),
        compiler_params=pltpu.CompilerParams(
            dimension_semantics=("parallel",),     # megacore sharding of M tiles (v7x)
            vmem_limit_bytes=vmem_limit),
        cost_estimate=pl.CostEstimate(flops=int(flops),
                                      transcendentals=int(transcendentals),
                                      bytes_accessed=int(bytes_accessed)),
    )(x2d, w_stack, b_stack)

    return out[:, :c_out].reshape(B, S, c_out)


if __name__ == "__main__":
    # Small shapes: batch=2, seq=8, in_channels=32, out_channels=32, num_fcs=2
    B, S, C_IN, C_OUT, NUM_FCS = 2, 8, 32, 32, 2

    key = jax.random.PRNGKey(0)
    key, kx = jax.random.split(key)
    x = jax.random.normal(kx, (B, S, C_IN), jnp.float32)

    params = init_fcmodules_params(key, C_IN, C_OUT, NUM_FCS)
    packed = pack_fcmodules_params(params, C_IN)

    out = fcmodules_forward(x, packed, activation="relu")
    out = jax.block_until_ready(out)
    assert out.shape == (B, S, C_OUT)
    assert out.dtype == jnp.float32

    # Reference 1: mirrors the kernel numerics (bf16 matmul operands, f32 accumulate).
    h = x.reshape(B * S, C_IN)
    for (w, b) in params:
        h = jnp.maximum(
            jnp.dot(h.astype(jnp.bfloat16), w.T.astype(jnp.bfloat16),
                    preferred_element_type=jnp.float32) + b, 0.0)
    ref_bf16 = h.reshape(B, S, C_OUT)
    assert jnp.allclose(out, ref_bf16, atol=2e-3, rtol=2e-3)

    # Reference 2: exact f32 PyTorch semantics (loose tolerance: bf16 operands).
    h = x.reshape(B * S, C_IN)
    for (w, b) in params:
        h = jnp.maximum(h @ w.T + b, 0.0)
    ref_f32 = h.reshape(B, S, C_OUT)
    assert jnp.allclose(out, ref_f32, atol=5e-2, rtol=5e-2)

    print("KERNEL_OK")
</pallas_src>

<mosaic_0001>
module attributes {stable_mosaic.version = 11 : i64} {
  func.func @_fused_fc_kernel(%arg0: i32, %arg1: memref<16x32xf32, #tpu.memory_space<vmem>>, %arg2: memref<2x128x128xbf16, #tpu.memory_space<vmem>>, %arg3: memref<2x1x128xf32, #tpu.memory_space<vmem>>, %arg4: memref<16x128xf32, #tpu.memory_space<vmem>>) attributes {dimension_semantics = [#tpu.dimension_semantics<parallel>], iteration_bounds = array<i64: 1>, scalar_prefetch = 0 : i64, scratch_operands = 0 : i64, tpu.core_type = #tpu.core_type<tc>, window_params = [{transform_indices = @transform_0, window_bounds = array<i64: 16, 32>}, {pipeline_mode = #tpu.pipeline_mode<synchronous>, transform_indices = @transform_1, window_bounds = array<i64: 2, 128, 128>}, {pipeline_mode = #tpu.pipeline_mode<synchronous>, transform_indices = @transform_2, window_bounds = array<i64: 2, 1, 128>}, {transform_indices = @transform_3, window_bounds = array<i64: 16, 128>}]} {
    %c0 = arith.constant 0 : index
    %c0_0 = arith.constant 0 : index
    %0 = vector.load %arg1[%c0, %c0_0] : memref<16x32xf32, #tpu.memory_space<vmem>>, vector<16x32xf32>
    %1 = arith.truncf %0 : vector<16x32xf32> to vector<16x32xbf16>
    %c0_1 = arith.constant 0 : index
    %c0_2 = arith.constant 0 : index
    %c0_3 = arith.constant 0 : index
    %2 = vector.load %arg2[%c0_1, %c0_2, %c0_3] : memref<2x128x128xbf16, #tpu.memory_space<vmem>>, vector<1x32x128xbf16>
    %3 = vector.shape_cast %2 : vector<1x32x128xbf16> to vector<32x128xbf16>
    %cst = arith.constant dense<0.000000e+00> : vector<16x128xf32>
    %4 = tpu.matmul %1, %3, %cst {dimension_numbers = #tpu.dot_dimension_numbers<[1], [0], [0], [1], [0, 0, 1, 1], [], []>} : vector<16x32xbf16>, vector<32x128xbf16>, vector<16x128xf32> -> vector<16x128xf32>
    %c0_4 = arith.constant 0 : index
    %c0_5 = arith.constant 0 : index
    %c0_6 = arith.constant 0 : index
    %5 = vector.load %arg3[%c0_4, %c0_5, %c0_6] : memref<2x1x128xf32, #tpu.memory_space<vmem>>, vector<1x1x128xf32>
    %6 = vector.shape_cast %5 : vector<1x1x128xf32> to vector<1x128xf32>
    %7 = vector.broadcast %6 : vector<1x128xf32> to vector<16x128xf32>
    %8 = arith.addf %4, %7 : vector<16x128xf32>
    %cst_7 = arith.constant 0.000000e+00 : f32
    %9 = vector.broadcast %cst_7 : f32 to vector<16x128xf32>
    %10 = arith.maximumf %8, %9 : vector<16x128xf32>
    %11 = arith.truncf %10 : vector<16x128xf32> to vector<16x128xbf16>
    %c1 = arith.constant 1 : index
    %c0_8 = arith.constant 0 : index
    %c0_9 = arith.constant 0 : index
    %12 = vector.load %arg2[%c1, %c0_8, %c0_9] : memref<2x128x128xbf16, #tpu.memory_space<vmem>>, vector<1x128x128xbf16>
    %13 = vector.shape_cast %12 : vector<1x128x128xbf16> to vector<128x128xbf16>
    %cst_10 = arith.constant dense<0.000000e+00> : vector<16x128xf32>
    %14 = tpu.matmul %11, %13, %cst_10 {dimension_numbers = #tpu.dot_dimension_numbers<[1], [0], [0], [1], [0, 0, 1, 1], [], []>} : vector<16x128xbf16>, vector<128x128xbf16>, vector<16x128xf32> -> vector<16x128xf32>
    %c1_11 = arith.constant 1 : index
    %c0_12 = arith.constant 0 : index
    %c0_13 = arith.constant 0 : index
    %15 = vector.load %arg3[%c1_11, %c0_12, %c0_13] : memref<2x1x128xf32, #tpu.memory_space<vmem>>, vector<1x1x128xf32>
    %16 = vector.shape_cast %15 : vector<1x1x128xf32> to vector<1x128xf32>
    %17 = vector.broadcast %16 : vector<1x128xf32> to vector<16x128xf32>
    %18 = arith.addf %14, %17 : vector<16x128xf32>
    %cst_14 = arith.constant 0.000000e+00 : f32
    %19 = vector.broadcast %cst_14 : f32 to vector<16x128xf32>
    %20 = arith.maximumf %18, %19 : vector<16x128xf32>
    %c0_15 = arith.constant 0 : index
    %c0_16 = arith.constant 0 : index
    %21 = vector.load %arg4[%c0_15, %c0_16] : memref<16x128xf32, #tpu.memory_space<vmem>>, vector<16x128xf32>
    tpu.vector_store %arg4[%c0_15, %c0_16], %20 {strides = array<i32>} : memref<16x128xf32, #tpu.memory_space<vmem>>, vector<16x128xf32>,
    return
  }
  func.func @transform_0(%arg0: i32) -> (i32, i32) {
    %c0_i32 = arith.constant 0 : i32
    %c0_i32_0 = arith.constant 0 : i32
    return %arg0, %c0_i32 : i32, i32
  }
  func.func @transform_1(%arg0: i32) -> (i32, i32, i32) {
    %c0_i32 = arith.constant 0 : i32
    %c0_i32_0 = arith.constant 0 : i32
    %c0_i32_1 = arith.constant 0 : i32
    %c0_i32_2 = arith.constant 0 : i32
    return %c0_i32, %c0_i32_0, %c0_i32_1 : i32, i32, i32
  }
  func.func @transform_2(%arg0: i32) -> (i32, i32, i32) {
    %c0_i32 = arith.constant 0 : i32
    %c0_i32_0 = arith.constant 0 : i32
    %c0_i32_1 = arith.constant 0 : i32
    %c0_i32_2 = arith.constant 0 : i32
    return %c0_i32, %c0_i32_0, %c0_i32_1 : i32, i32, i32
  }
  func.func @transform_3(%arg0: i32) -> (i32, i32) {
    %c0_i32 = arith.constant 0 : i32
    %c0_i32_0 = arith.constant 0 : i32
    return %arg0, %c0_i32 : i32, i32
  }
}

</mosaic_0001>

<llo_original>
// kernel: tpu_custom_call.1
$region0: #{tpu_custom_call.1}
  #allocation0 [shape = 'u32[]', space=smem, size = 0x4, offset = 0x4, fixed_abs, tag = 'smem constant byte address 0x4 - core index']
  #allocation1 [shape = 'u32[144,128]{1,0:T(1,128)}', space=vmem, size = 0x12000, scoped, tag = 'internal scratch']
  %s0 = inlined_call_operand.hbm [shape: f32[16,32], index: 0, kind: input, shape index: {}]
  %s1 = inlined_call_operand.hbm [shape: bf16[2,128,128], index: 1, kind: input, shape index: {}]
  %s2 = inlined_call_operand.vmem [shape: f32[2,1,128], index: 2, kind: input, shape index: {}]
  %s3 = inlined_call_operand.hbm [shape: f32[16,128], index: 3, kind: output, shape index: {}]
  %s4 = sld [smem:[#allocation0]]
  $region30: #{tpu_custom_call.1} parent=0
    _
  %s6 = ssub.s32 1, %s4
  %s7 = scalar_select 0, %s6, %s4
  $region1: #{tpu_custom_call.1} parent=0
    #allocation2 [shape = 'u8[8192]{0}', space=vmem, size = 0x2000, scoped, tag = 'input window, operand 0, single buffered']
    #allocation3 [shape = 's32[1]{0}', space=sflag, size = 0x4, scoped, tag = 'scoped memory for tpu_custom_call.1']
    #allocation4 [shape = 's32[1]{0}', space=sflag, size = 0x4, scoped, tag = 'scoped memory for tpu_custom_call.1']
    #allocation5 [shape = 'u8[65536]{0}', space=vmem, size = 0x10000, scoped, tag = 'input window, operand 1, single buffered']
    #allocation6 [shape = 's32[1]{0}', space=sflag, size = 0x4, scoped, tag = 'scoped memory for tpu_custom_call.1']
    #allocation7 [shape = 'u8[8192]{0}', space=vmem, size = 0x2000, scoped, tag = 'output window, operand 0, single buffered']
    %8 = vsyncpa [#allocation3], 0
    %9 = vsyncpa [#allocation6], 0
    %10 = vsyncpa [#allocation4], 0
    // Predicated region
    $region2: #{tpu_custom_call.1} parent=1 // pred_check
      _
    $region3: #{tpu_custom_call.1} parent=1 // pred_check_branch
      %12 = sbr.rel (0) target = $region5
    $region4: #{tpu_custom_call.1} parent=1 // pred_region
      %s14 = ssub.s32 256, 256
      %15 = vsyncadd [#allocation3], %s14
      %s16 = sshll.u32 [#allocation2], 4
      %s17 = int_to_ptr.vmem [resolvable:$true] %s16
      %22 = dma.hbm_to_vmem [thread:$0]  %s0, 256, %s17, [#allocation3], 128, 128, 8
    $region5: #{tpu_custom_call.1} parent=1 // pred_fallthru
      _
    // Predicated region
    $region6: #{tpu_custom_call.1} parent=1 // pred_check
      _
    $region7: #{tpu_custom_call.1} parent=1 // pred_check_branch
      %24 = sbr.rel (0) target = $region9
    $region8: #{tpu_custom_call.1} parent=1 // pred_region
      %s26 = ssub.s32 2048, 2048
      %27 = vsyncadd [#allocation6], %s26
      %s28 = sshll.u32 [#allocation5], 4
      %s29 = int_to_ptr.vmem [resolvable:$true] %s28
      %34 = dma.hbm_to_vmem [thread:$0]  %s1, 2048, %s29, [#allocation6], 64, 64, 4
    $region9: #{tpu_custom_call.1} parent=1 // pred_fallthru
      _
    // Predicated region
    $region10: #{tpu_custom_call.1} parent=1 // pred_check
      _
    $region11: #{tpu_custom_call.1} parent=1 // pred_check_branch
      %36 = sbr.rel (0) target = $region13
    $region12: #{tpu_custom_call.1} parent=1 // pred_region
      _
    $region13: #{tpu_custom_call.1} parent=1 // pred_fallthru
      _
    // Predicated region
    $region14: #{tpu_custom_call.1} parent=1 // pred_check
      _
    $region15: #{tpu_custom_call.1} parent=1 // pred_check_branch
      %38 = sbr.rel (0) target = $region17
    $region16: #{tpu_custom_call.1} parent=1 // pred_region
      %39 = dma.done [#allocation3], 256
    $region17: #{tpu_custom_call.1} parent=1 // pred_fallthru
      _
    // Predicated region
    $region18: #{tpu_custom_call.1} parent=1 // pred_check
      _
    $region19: #{tpu_custom_call.1} parent=1 // pred_check_branch
      %41 = sbr.rel (0) target = $region21
    $region20: #{tpu_custom_call.1} parent=1 // pred_region
      %42 = dma.done [#allocation6], 2048
    $region21: #{tpu_custom_call.1} parent=1 // pred_fallthru
      _
    %v44 = vld [vmem:[#allocation2] sm:$0xff]
    %v45 = vld [vmem:[#allocation2 + $0x8] sm:$0xff]
    %v46 = vpack.c.bf16 %v45, %v44
    %v47 = vld [vmem:[#allocation5] sm:$0xf]
    %v48 = vld [vmem:[#allocation5 + $0x4] sm:$0xf]
    %v49 = vld [vmem:[#allocation5 + $0x8] sm:$0xf]
    %v50 = vld [vmem:[#allocation5 + $0xc] sm:$0xf]
    %v51 = vld [vmem:[%s2] sm:$0x1]
    %v53 = vlaneseq
    %v54 = vshrl.u32 %v53, 7
    %v55 = vsub.s32 0, %v54
    %v56 = vrot.slane %v51, %v55
    %v62 = vunpack.c.l.b16 %v47
    %v63 = vunpack.c.l.b16 %v48
    %v64 = vunpack.c.l.b16 %v49
    %v65 = vunpack.c.l.b16 %v50
    %v66 = vpack.c.b16 %v63, %v62
    %v67 = vpack.c.b16 %v65, %v64
    %vm70 = vcmask 261120
    %v72 = vsel %vm70, %v46, 0
    %74 = vmatprep.subr.bf16.mxu0 0
    %75 = vmatpush1.bf16.msra.mxu0 %v66
    %76 = vmatprep.subr.bf16.mxu0 0
    %77 = vmatpush1.bf16.msra.mxu0 %v67
    %78 = vmatprep.subr.bf16.mxu0 0
    %79 = vmatpush1.bf16.msra.mxu0 0
    %80 = vmatprep.subr.bf16.mxu0 0
    %81 = vmatpush1.bf16.msra.mxu0 0
    %82 = vmatprep.subr.bf16.mxu0 0
    %83 = vmatpush1.bf16.msra.mxu0 0
    %84 = vmatprep.subr.bf16.mxu0 0
    %85 = vmatpush1.bf16.msra.mxu0 0
    %86 = vmatprep.subr.bf16.mxu0 0
    %87 = vmatpush1.bf16.msra.mxu0 0
    %88 = vmatprep.subr.bf16.mxu0 0
    %89 = vmatpush1.bf16.msra.mxu0 0
    %90 = vmatprep.subr.bf16.mxu0 0
    %91 = vmatpush1.bf16.msra.mxu0 0
    %92 = vmatprep.subr.bf16.mxu0 0
    %93 = vmatpush1.bf16.msra.mxu0 0
    %94 = vmatprep.subr.bf16.mxu0 0
    %95 = vmatpush1.bf16.msra.mxu0 0
    %96 = vmatprep.subr.bf16.mxu0 0
    %97 = vmatpush1.bf16.msra.mxu0 0
    %98 = vmatprep.subr.bf16.mxu0 0
    %99 = vmatpush1.bf16.msra.mxu0 0
    %100 = vmatprep.subr.bf16.mxu0 0
    %101 = vmatpush1.bf16.msra.mxu0 0
    %102 = vmatprep.subr.bf16.mxu0 0
    %103 = vmatpush1.bf16.msra.mxu0 0
    %104 = vmatprep.subr.bf16.mxu0 0
    %105 = vmatpush1.bf16.msra.mxu0 0
    %106 = vmatprep.mubr.bf16.mxu0 0
    %107 = vmatmul.mubr.bf16.gmra.mrb[0].mxu0 %v72
    %v108 = vpop.f32.mrb[0].mxu0
    %v109 = vadd.f32 %v56, %v108
    %v110 = vpop.f32.mrb[0].mxu0
    %v111 = vpop.f32.mrb[0].mxu0
    %v112 = vadd.f32 %v56, %v111
    %v113 = vpop.f32.mrb[0].mxu0
    %114 = vdwg.mxu0
    %v115 = vmax.f32 %v109, 0.0
    %v116 = vmax.f32 %v112, 0.0
    %v117 = vpack.c.bf16 %v116, %v115
    %s118 = scalar_lea.vmem [#allocation5], 64
    %v119 = vld [vmem:[%s118] sm:$0xf]
    %v120 = vld [vmem:[%s118 + $0x4] sm:$0xf]
    %v121 = vld [vmem:[%s118 + $0x8] sm:$0xf]
    %v122 = vld [vmem:[%s118 + $0xc] sm:$0xf]
    %v123 = vld [vmem:[%s118 + $0x10] sm:$0xf]
    %v124 = vld [vmem:[%s118 + $0x14] sm:$0xf]
    %v125 = vld [vmem:[%s118 + $0x18] sm:$0xf]
    %v126 = vld [vmem:[%s118 + $0x1c] sm:$0xf]
    %v127 = vld [vmem:[%s118 + $0x20] sm:$0xf]
    %v128 = vld [vmem:[%s118 + $0x24] sm:$0xf]
    %v129 = vld [vmem:[%s118 + $0x28] sm:$0xf]
    %v130 = vld [vmem:[%s118 + $0x2c] sm:$0xf]
    %v131 = vld [vmem:[%s118 + $0x30] sm:$0xf]
    %v132 = vld [vmem:[%s118 + $0x34] sm:$0xf]
    %v133 = vld [vmem:[%s118 + $0x38] sm:$0xf]
    %v134 = vld [vmem:[%s118 + $0x3c] sm:$0xf]
    %s135 = scalar_lea.vmem %s2, 1
    %v136 = vld [vmem:[%s135] sm:$0x1]
    %v138 = vlaneseq
    %v139 = vshrl.u32 %v138, 7
    %v140 = vsub.s32 0, %v139
    %v141 = vrot.slane %v136, %v140
    %v159 = vunpack.c.l.b16 %v119
    %v160 = vunpack.c.l.b16 %v120
    %v161 = vunpack.c.l.b16 %v121
    %v162 = vunpack.c.l.b16 %v122
    %v163 = vunpack.c.l.b16 %v123
    %v164 = vunpack.c.l.b16 %v124
    %v165 = vunpack.c.l.b16 %v125
    %v166 = vunpack.c.l.b16 %v126
    %v167 = vunpack.c.l.b16 %v127
    %v168 = vunpack.c.l.b16 %v128
    %v169 = vunpack.c.l.b16 %v129
    %v170 = vunpack.c.l.b16 %v130
    %v171 = vunpack.c.l.b16 %v131
    %v172 = vunpack.c.l.b16 %v132
    %v173 = vunpack.c.l.b16 %v133
    %v174 = vunpack.c.l.b16 %v134
    %v175 = vpack.c.b16 %v160, %v159
    %v176 = vpack.c.b16 %v162, %v161
    %v177 = vpack.c.b16 %v164, %v163
    %v178 = vpack.c.b16 %v166, %v165
    %v179 = vpack.c.b16 %v168, %v167
    %v180 = vpack.c.b16 %v170, %v169
    %v181 = vpack.c.b16 %v172, %v171
    %v182 = vpack.c.b16 %v174, %v173
    %191 = vmatprep.subr.bf16.mxu0 0
    %192 = vmatpush1.bf16.msra.mxu0 %v175
    %193 = vmatprep.subr.bf16.mxu0 0
    %194 = vmatpush1.bf16.msra.mxu0 %v176
    %195 = vmatprep.subr.bf16.mxu0 0
    %196 = vmatpush1.bf16.msra.mxu0 %v177
    %197 = vmatprep.subr.bf16.mxu0 0
    %198 = vmatpush1.bf16.msra.mxu0 %v178
    %199 = vmatprep.subr.bf16.mxu0 0
    %200 = vmatpush1.bf16.msra.mxu0 %v179
    %201 = vmatprep.subr.bf16.mxu0 0
    %202 = vmatpush1.bf16.msra.mxu0 %v180
    %203 = vmatprep.subr.bf16.mxu0 0
    %204 = vmatpush1.bf16.msra.mxu0 %v181
    %205 = vmatprep.subr.bf16.mxu0 0
    %206 = vmatpush1.bf16.msra.mxu0 %v182
    %207 = vmatprep.subr.bf16.mxu0 0
    %208 = vmatpush1.bf16.msra.mxu0 0
    %209 = vmatprep.subr.bf16.mxu0 0
    %210 = vmatpush1.bf16.msra.mxu0 0
    %211 = vmatprep.subr.bf16.mxu0 0
    %212 = vmatpush1.bf16.msra.mxu0 0
    %213 = vmatprep.subr.bf16.mxu0 0
    %214 = vmatpush1.bf16.msra.mxu0 0
    %215 = vmatprep.subr.bf16.mxu0 0
    %216 = vmatpush1.bf16.msra.mxu0 0
    %217 = vmatprep.subr.bf16.mxu0 0
    %218 = vmatpush1.bf16.msra.mxu0 0
    %219 = vmatprep.subr.bf16.mxu0 0
    %220 = vmatpush1.bf16.msra.mxu0 0
    %221 = vmatprep.subr.bf16.mxu0 0
    %222 = vmatpush1.bf16.msra.mxu0 0
    %223 = vmatprep.mubr.bf16.mxu0 0
    %224 = vmatmul.mubr.bf16.gmra.mrb[0].mxu0 %v117
    %v225 = vpop.f32.mrb[0].mxu0
    %v226 = vadd.f32 %v141, %v225
    %v227 = vpop.f32.mrb[0].mxu0
    %v228 = vpop.f32.mrb[0].mxu0
    %v229 = vadd.f32 %v141, %v228
    %v230 = vpop.f32.mrb[0].mxu0
    %231 = vdwg.mxu0
    %v232 = vmax.f32 %v226, 0.0
    %v233 = vmax.f32 %v229, 0.0
    %234 = vst [vmem:[#allocation7] sm:$0xff] %v232
    %235 = vst [vmem:[#allocation7 + $0x8] sm:$0xff] %v233
    // Predicated region
    $region22: #{tpu_custom_call.1} parent=1 // pred_check
      _
    $region23: #{tpu_custom_call.1} parent=1 // pred_check_branch
      %237 = sbr.rel (0) target = $region25
    $region24: #{tpu_custom_call.1} parent=1 // pred_region
      %s239 = ssub.s32 256, 256
      %240 = vsyncadd [#allocation4], %s239
      %s241 = sshll.u32 [#allocation7], 4
      %s242 = int_to_ptr.vmem [resolvable:$true] %s241
      %247 = dma.vmem_to_hbm [thread:$0]  %s242, 256, %s3, [#allocation4], 128, 128, 8
    $region25: #{tpu_custom_call.1} parent=1 // pred_fallthru
      _
    // Predicated region
    $region26: #{tpu_custom_call.1} parent=1 // pred_check
      _
    $region27: #{tpu_custom_call.1} parent=1 // pred_check_branch
      %249 = sbr.rel (0) target = $region29
    $region28: #{tpu_custom_call.1} parent=1 // pred_region
      %250 = dma.done [#allocation4], 256
    $region29: #{tpu_custom_call.1} parent=1 // pred_fallthru
      _
    %251 = vsyncpa [#allocation3], 1
    %252 = vsyncpa [#allocation6], 1
    %253 = vsyncpa [#allocation4], 1

</llo_original>
